<compile_context>
chip_gen: v7x
topology: tpu7x:2x2x1
jax: 0.10.0
libtpu: 0.0.40
codegen_flags: <defaults>
</compile_context>

<pallas_src>
import jax
import jax.numpy as jnp
from jax.experimental import pallas as pl
from jax.experimental.pallas import tpu as pltpu


_HEAD_LANES = 128   # per-head partial sums live in lanes -> supports up to 128 heads
_ROW_ALIGN = 16     # row-tile alignment (fine for f32, required-friendly for bf16)


def _cdiv(a, b):
    return -(-a // b)


def _round_up(a, b):
    return _cdiv(a, b) * b


# ----------------------------------------------------------------------------
# Fused masked cross-entropy kernel (all heads in one call)
# ----------------------------------------------------------------------------
def _fused_ce_kernel(logits_ref, meta_ref, loss_ref, cnt_ref, acc_loss, acc_cnt):
    i = pl.program_id(1)

    @pl.when(i == 0)
    def _():
        acc_loss[...] = jnp.zeros_like(acc_loss)
        acc_cnt[...] = jnp.zeros_like(acc_cnt)

    logits = logits_ref[...].astype(jnp.float32)            # (TR, C), cast in-kernel
    meta = meta_ref[...]                                     # (TR, 2) int32
    tgt = meta[:, 0:1]                                       # (TR, 1)  -1 => invalid row
    head = meta[:, 1:2]                                      # (TR, 1)
    valid = (tgt >= 0).astype(jnp.float32)                   # (TR, 1)

    tr, c = logits.shape
    # numerically-stable logsumexp per row
    m = jnp.max(logits, axis=-1, keepdims=True)              # (TR, 1)
    ex = jnp.exp(logits - m)                                  # EUP
    lse = m + jnp.log(jnp.sum(ex, axis=-1, keepdims=True))    # (TR, 1)

    # gather logits[r, tgt[r]] via masked lane reduce (no float one-hot multiply)
    col = jax.lax.broadcasted_iota(jnp.int32, (tr, c), 1)
    picked = jnp.sum(jnp.where(col == tgt, logits, 0.0), axis=-1, keepdims=True)

    nll = valid * (lse - picked)                              # (TR, 1)

    # lane-dense per-head accumulation: lane index == head id
    lane = jax.lax.broadcasted_iota(jnp.int32, (tr, _HEAD_LANES), 1)
    hsel = (lane == head).astype(jnp.float32)                 # (TR, 128)
    acc_loss[...] += jnp.sum(nll * hsel, axis=0, keepdims=True)    # (1, 128)
    acc_cnt[...] += jnp.sum(valid * hsel, axis=0, keepdims=True)   # (1, 128)

    @pl.when(i == pl.num_programs(1) - 1)
    def _():
        loss_ref[...] = acc_loss[...]
        cnt_ref[...] = acc_cnt[...]


def _fused_ce_group(logit_blocks, meta_blocks, n_heads, tile_rows):
    """Run the fused CE kernel for heads sharing one class width.

    Returns a list of `n_heads` scalar mean-CE losses (lane h of the partials).
    """
    c = int(logit_blocks[0].shape[-1])
    n = sum(int(b.shape[0]) for b in logit_blocks)

    # Row tiling: big tiles by default, clamped/aligned for tiny inputs.
    tr = _round_up(int(tile_rows), _ROW_ALIGN)
    tr = max(_ROW_ALIGN, min(tr, _round_up(n, _ROW_ALIGN)))
    n_outer = 2 if _cdiv(n, tr) >= 2 else 1        # lets v7x shard across both TCs
    n_inner = _cdiv(n, n_outer * tr)
    n_padded = n_outer * n_inner * tr

    dtype = jnp.result_type(*[b.dtype for b in logit_blocks])
    blocks = [b.astype(dtype) for b in logit_blocks]
    metas = list(meta_blocks)
    pad = n_padded - n
    if pad:
        blocks.append(jnp.zeros((pad, c), dtype))                 # padding rows
        metas.append(jnp.full((pad, 2), -1, jnp.int32))           # target=-1 => masked
    logits_cat = jnp.concatenate(blocks, axis=0)                  # (n_padded, C)
    metas_cat = jnp.concatenate(metas, axis=0)                    # (n_padded, 2)

    loss_p, cnt_p = pl.pallas_call(
        _fused_ce_kernel,
        out_shape=(jax.ShapeDtypeStruct((n_outer, _HEAD_LANES), jnp.float32),
                   jax.ShapeDtypeStruct((n_outer, _HEAD_LANES), jnp.float32)),
        grid_spec=pltpu.PrefetchScalarGridSpec(
            num_scalar_prefetch=0,
            grid=(n_outer, n_inner),
            in_specs=[
                pl.BlockSpec((tr, c), lambda o, i: (o * n_inner + i, 0)),
                pl.BlockSpec((tr, 2), lambda o, i: (o * n_inner + i, 0)),
            ],
            out_specs=[
                pl.BlockSpec((1, _HEAD_LANES), lambda o, i: (o, 0)),
                pl.BlockSpec((1, _HEAD_LANES), lambda o, i: (o, 0)),
            ],
            scratch_shapes=[pltpu.VMEM((1, _HEAD_LANES), jnp.float32),
                            pltpu.VMEM((1, _HEAD_LANES), jnp.float32)],
        ),
        compiler_params=pltpu.CompilerParams(
            dimension_semantics=("parallel", "arbitrary")),
    )(logits_cat, metas_cat)

    loss_sum = jnp.sum(loss_p, axis=0)     # (128,) per-head NLL sums
    cnt = jnp.sum(cnt_p, axis=0)           # (128,) per-head valid-row counts
    return [loss_sum[h] / cnt[h] for h in range(n_heads)]


def fused_masked_cross_entropy(logits_list, targets_list, valid_list, tile_rows=1024):
    """Per-entry mean cross-entropy, fused into one Pallas call per class width.

    logits_list[k]: (N_k, C_k) float; targets_list[k]: (N_k,) int;
    valid_list[k]: (N_k,) bool or None (None => all rows valid).
    Each returned scalar equals torch.nn.CrossEntropyLoss()(logits[valid], targets[valid]).
    """
    assert len(logits_list) == len(targets_list) == len(valid_list)

    # group heads by class width so they can share one (N, C) slab
    groups = {}
    for k, lg in enumerate(logits_list):
        groups.setdefault(int(lg.shape[-1]), []).append(k)

    losses = [None] * len(logits_list)
    for c, idxs in groups.items():
        assert len(idxs) <= _HEAD_LANES, "too many heads for lane-indexed accumulation"
        lg_blocks, meta_blocks = [], []
        for h, k in enumerate(idxs):
            lg = logits_list[k].reshape(-1, c)
            tgt = targets_list[k].reshape(-1).astype(jnp.int32)
            if valid_list[k] is not None:
                tgt = jnp.where(valid_list[k].reshape(-1), tgt, -1)   # -1 => masked row
            head_col = jnp.full_like(tgt, h)
            meta_blocks.append(jnp.stack([tgt, head_col], axis=1))    # (N_k, 2)
            lg_blocks.append(lg)
        group_losses = _fused_ce_group(lg_blocks, meta_blocks, len(idxs), tile_rows)
        for h, k in enumerate(idxs):
            losses[k] = group_losses[h]
    return losses


# ----------------------------------------------------------------------------
# compute_loss_cp2_further.forward equivalent
# ----------------------------------------------------------------------------
def compute_loss_cp2_further_forward(model_fn, inputs, targets, masks,
                                     further_experiment_targets, tile_rows=1024):
    pred_targets, pred_further_targets = model_fn(inputs, masks)

    # ~masks.T flattened exactly the way pred.reshape(-1, C) flattens (T, B, C)
    valid_tok = jnp.logical_not(masks.T).reshape(-1)          # (T*B,)

    logits_list, targets_list, valid_list = [], [], []
    for i, pred in enumerate(pred_targets):
        logits_list.append(pred.reshape(-1, pred.shape[-1]))   # (T*B, C), native dtype
        targets_list.append(targets[i].reshape(-1))
        valid_list.append(valid_tok)
    for idx, pred in enumerate(pred_further_targets):
        logits_list.append(pred)                               # (B, C2)
        targets_list.append(further_experiment_targets[idx])
        valid_list.append(None)                                # plain CE over all rows

    losses = fused_masked_cross_entropy(logits_list, targets_list, valid_list,
                                        tile_rows=tile_rows)
    return sum(losses), pred_targets, pred_further_targets


# ----------------------------------------------------------------------------
# Synthetic stand-in model (the original `model` is external to this module).
# Two per-token heads (T, B, H) -> (T, B, C) and two pooled "further" heads
# (B, H) -> (B, C2). Deterministic init. Plain-JAX glue only.
# ----------------------------------------------------------------------------
def make_model(key, hidden, n_classes, n_further_classes,
               n_heads=2, n_further_heads=2):
    keys = jax.random.split(key, n_heads + n_further_heads)
    w_heads = [jax.random.normal(keys[i], (hidden, n_classes), jnp.float32) * 0.1
               for i in range(n_heads)]
    w_further = [jax.random.normal(keys[n_heads + i],
                                   (hidden, n_further_classes), jnp.float32) * 0.1
                 for i in range(n_further_heads)]

    def model_fn(inputs, masks):
        # inputs: (T, B, H); masks: (B, T) bool
        del masks
        pred_targets = [jnp.einsum("tbh,hc->tbc", inputs, w) for w in w_heads]
        pooled = jnp.mean(inputs, axis=0)                      # (B, H)
        pred_further = [pooled @ w for w in w_further]         # (B, C2)
        return pred_targets, pred_further

    return model_fn


# pure-JAX reference for the CE, used as a silent sanity check
def _ref_masked_ce(logits, targets, valid):
    logits = logits.astype(jnp.float32)
    lse = jax.scipy.special.logsumexp(logits, axis=-1)
    picked = jnp.take_along_axis(logits, targets[:, None].astype(jnp.int32),
                                 axis=-1)[:, 0]
    v = valid.astype(jnp.float32)
    return jnp.sum(v * (lse - picked)) / jnp.sum(v)


if __name__ == "__main__":
    T, B, H = 8, 4, 32            # seq, batch, hidden
    C = 128                        # classes for per-token targets
    C2 = 128                       # classes for "further experiment" targets
    N_HEADS, N_FURTHER = 2, 2

    root = jax.random.PRNGKey(0)
    k_model, k_in, k_mask, k_tgt, k_ftgt = jax.random.split(root, 5)

    model_fn = make_model(k_model, H, C, C2, N_HEADS, N_FURTHER)

    inputs = jax.random.normal(k_in, (T, B, H), jnp.float32)
    masks = jax.random.bernoulli(k_mask, p=0.3, shape=(B, T))          # True = masked out
    targets = [jax.random.randint(k, (T, B), 0, C, jnp.int32)
               for k in jax.random.split(k_tgt, N_HEADS)]
    further_experiment_targets = [jax.random.randint(k, (B,), 0, C2, jnp.int32)
                                  for k in jax.random.split(k_ftgt, N_FURTHER)]

    @jax.jit
    def run(inputs, masks, targets, further_targets):
        return compute_loss_cp2_further_forward(
            model_fn, inputs, targets, masks, further_targets)

    total_loss, pred_targets, pred_further_targets = run(
        inputs, masks, targets, further_experiment_targets)
    total_loss = jax.block_until_ready(total_loss)

    # reference check (plain JAX)
    ref_losses = []
    valid = jnp.logical_not(masks.T).reshape(-1)
    for i, pred in enumerate(pred_targets):
        ref_losses.append(_ref_masked_ce(pred.reshape(-1, C),
                                         targets[i].reshape(-1), valid))
    for idx, pred in enumerate(pred_further_targets):
        ref_losses.append(_ref_masked_ce(pred, further_experiment_targets[idx],
                                         jnp.ones((pred.shape[0],))))
    ref_total = sum(ref_losses)
    assert jnp.allclose(total_loss, ref_total, rtol=1e-4, atol=1e-4), (
        total_loss, ref_total)

    print("KERNEL_OK")
</pallas_src>

<mosaic_0001>
module attributes {stable_mosaic.version = 11 : i64} {
  func.func @_fused_ce_kernel(%arg0: i32, %arg1: i32, %arg2: memref<80x128xf32, #tpu.memory_space<vmem>>, %arg3: memref<80x2xi32, #tpu.memory_space<vmem>>, %arg4: memref<1x128xf32, #tpu.memory_space<vmem>>, %arg5: memref<1x128xf32, #tpu.memory_space<vmem>>, %arg6: memref<1x128xf32, #tpu.memory_space<vmem>>, %arg7: memref<1x128xf32, #tpu.memory_space<vmem>>) attributes {dimension_semantics = [#tpu.dimension_semantics<parallel>, #tpu.dimension_semantics<arbitrary>], iteration_bounds = array<i64: 1, 1>, scalar_prefetch = 0 : i64, scratch_operands = 2 : i64, tpu.core_type = #tpu.core_type<tc>, window_params = [{transform_indices = @transform_0, window_bounds = array<i64: 80, 128>}, {transform_indices = @transform_1, window_bounds = array<i64: 80, 2>}, {transform_indices = @transform_2, window_bounds = array<i64: 1, 128>}, {transform_indices = @transform_3, window_bounds = array<i64: 1, 128>}]} {
    %c0_i32 = arith.constant 0 : i32
    %0 = arith.cmpi eq, %arg1, %c0_i32 : i32
    %1 = arith.extui %0 : i1 to i32
    %c0_i32_0 = arith.constant 0 : i32
    %2 = arith.cmpi ne, %1, %c0_i32_0 : i32
    scf.if %2 {
      %cst_20 = arith.constant 0.000000e+00 : f32
      %51 = vector.broadcast %cst_20 : f32 to vector<1x128xf32>
      %c0_21 = arith.constant 0 : index
      %c0_22 = arith.constant 0 : index
      %52 = vector.load %arg6[%c0_21, %c0_22] : memref<1x128xf32, #tpu.memory_space<vmem>>, vector<1x128xf32>
      tpu.vector_store %arg6[%c0_21, %c0_22], %51 {strides = array<i32>} : memref<1x128xf32, #tpu.memory_space<vmem>>, vector<1x128xf32>,
      %cst_23 = arith.constant 0.000000e+00 : f32
      %53 = vector.broadcast %cst_23 : f32 to vector<1x128xf32>
      %c0_24 = arith.constant 0 : index
      %c0_25 = arith.constant 0 : index
      %54 = vector.load %arg7[%c0_24, %c0_25] : memref<1x128xf32, #tpu.memory_space<vmem>>, vector<1x128xf32>
      tpu.vector_store %arg7[%c0_24, %c0_25], %53 {strides = array<i32>} : memref<1x128xf32, #tpu.memory_space<vmem>>, vector<1x128xf32>,
    } else {
    }
    %c0 = arith.constant 0 : index
    %c0_1 = arith.constant 0 : index
    %3 = vector.load %arg2[%c0, %c0_1] : memref<80x128xf32, #tpu.memory_space<vmem>>, vector<80x128xf32>
    %c0_2 = arith.constant 0 : index
    %c0_3 = arith.constant 0 : index
    %4 = vector.load %arg3[%c0_2, %c0_3] : memref<80x2xi32, #tpu.memory_space<vmem>>, vector<80x2xi32>
    %5 = vector.extract_strided_slice %4 {offsets = [0, 0], sizes = [80, 1], strides = [1, 1]} : vector<80x2xi32> to vector<80x1xi32>
    %6 = vector.extract_strided_slice %4 {offsets = [0, 1], sizes = [80, 1], strides = [1, 1]} : vector<80x2xi32> to vector<80x1xi32>
    %c0_i32_4 = arith.constant 0 : i32
    %7 = vector.broadcast %c0_i32_4 : i32 to vector<80x1xi32>
    %8 = arith.cmpi sge, %5, %7 : vector<80x1xi32>
    %9 = arith.extui %8 : vector<80x1xi1> to vector<80x1xi32>
    %10 = arith.sitofp %9 : vector<80x1xi32> to vector<80x1xf32>
    %cst = arith.constant dense<0xFF800000> : vector<80xf32>
    %11 = vector.multi_reduction <maximumf>, %3, %cst [1] : vector<80x128xf32> to vector<80xf32>
    %12 = vector.shape_cast %11 : vector<80xf32> to vector<80x1xf32>
    %13 = vector.broadcast %12 : vector<80x1xf32> to vector<80x128xf32>
    %14 = arith.subf %3, %13 : vector<80x128xf32>
    %15 = math.exp %14 : vector<80x128xf32>
    %cst_5 = arith.constant dense<0.000000e+00> : vector<80xf32>
    %16 = vector.multi_reduction <add>, %15, %cst_5 [1] : vector<80x128xf32> to vector<80xf32>
    %17 = vector.shape_cast %16 : vector<80xf32> to vector<80x1xf32>
    %18 = math.log %17 : vector<80x1xf32>
    %19 = arith.addf %12, %18 : vector<80x1xf32>
    %20 = tpu.iota {dimensions = array<i32: 1>} : vector<80x128xi32>
    %21 = vector.broadcast %5 : vector<80x1xi32> to vector<80x128xi32>
    %22 = arith.cmpi eq, %20, %21 : vector<80x128xi32>
    %cst_6 = arith.constant 0.000000e+00 : f32
    %23 = vector.broadcast %cst_6 : f32 to vector<80x128xf32>
    %24 = arith.select %22, %3, %23 : vector<80x128xi1>, vector<80x128xf32>
    %cst_7 = arith.constant dense<0.000000e+00> : vector<80xf32>
    %25 = vector.multi_reduction <add>, %24, %cst_7 [1] : vector<80x128xf32> to vector<80xf32>
    %26 = vector.shape_cast %25 : vector<80xf32> to vector<80x1xf32>
    %27 = arith.subf %19, %26 : vector<80x1xf32>
    %28 = arith.mulf %10, %27 : vector<80x1xf32>
    %29 = tpu.iota {dimensions = array<i32: 1>} : vector<80x128xi32>
    %30 = vector.broadcast %6 : vector<80x1xi32> to vector<80x128xi32>
    %31 = arith.cmpi eq, %29, %30 : vector<80x128xi32>
    %32 = arith.extui %31 : vector<80x128xi1> to vector<80x128xi32>
    %33 = arith.sitofp %32 : vector<80x128xi32> to vector<80x128xf32>
    %c0_8 = arith.constant 0 : index
    %c0_9 = arith.constant 0 : index
    %34 = vector.load %arg6[%c0_8, %c0_9] : memref<1x128xf32, #tpu.memory_space<vmem>>, vector<1x128xf32>
    %35 = vector.broadcast %28 : vector<80x1xf32> to vector<80x128xf32>
    %36 = arith.mulf %35, %33 : vector<80x128xf32>
    %cst_10 = arith.constant dense<0.000000e+00> : vector<128xf32>
    %37 = vector.multi_reduction <add>, %36, %cst_10 [0] : vector<80x128xf32> to vector<128xf32>
    %38 = vector.shape_cast %37 : vector<128xf32> to vector<1x128xf32>
    %39 = arith.addf %34, %38 : vector<1x128xf32>
    %c0_11 = arith.constant 0 : index
    %c0_12 = arith.constant 0 : index
    %40 = vector.load %arg6[%c0_11, %c0_12] : memref<1x128xf32, #tpu.memory_space<vmem>>, vector<1x128xf32>
    tpu.vector_store %arg6[%c0_11, %c0_12], %39 {strides = array<i32>} : memref<1x128xf32, #tpu.memory_space<vmem>>, vector<1x128xf32>,
    %c0_13 = arith.constant 0 : index
    %c0_14 = arith.constant 0 : index
    %41 = vector.load %arg7[%c0_13, %c0_14] : memref<1x128xf32, #tpu.memory_space<vmem>>, vector<1x128xf32>
    %42 = vector.broadcast %10 : vector<80x1xf32> to vector<80x128xf32>
    %43 = arith.mulf %42, %33 : vector<80x128xf32>
    %cst_15 = arith.constant dense<0.000000e+00> : vector<128xf32>
    %44 = vector.multi_reduction <add>, %43, %cst_15 [0] : vector<80x128xf32> to vector<128xf32>
    %45 = vector.shape_cast %44 : vector<128xf32> to vector<1x128xf32>
    %46 = arith.addf %41, %45 : vector<1x128xf32>
    %c0_16 = arith.constant 0 : index
    %c0_17 = arith.constant 0 : index
    %47 = vector.load %arg7[%c0_16, %c0_17] : memref<1x128xf32, #tpu.memory_space<vmem>>, vector<1x128xf32>
    tpu.vector_store %arg7[%c0_16, %c0_17], %46 {strides = array<i32>} : memref<1x128xf32, #tpu.memory_space<vmem>>, vector<1x128xf32>,
    %c0_i32_18 = arith.constant 0 : i32
    %48 = arith.cmpi eq, %arg1, %c0_i32_18 : i32
    %49 = arith.extui %48 : i1 to i32
    %c0_i32_19 = arith.constant 0 : i32
    %50 = arith.cmpi ne, %49, %c0_i32_19 : i32
    scf.if %50 {
      %c0_20 = arith.constant 0 : index
      %c0_21 = arith.constant 0 : index
      %51 = vector.load %arg6[%c0_20, %c0_21] : memref<1x128xf32, #tpu.memory_space<vmem>>, vector<1x128xf32>
      %c0_22 = arith.constant 0 : index
      %c0_23 = arith.constant 0 : index
      %52 = vector.load %arg4[%c0_22, %c0_23] : memref<1x128xf32, #tpu.memory_space<vmem>>, vector<1x128xf32>
      tpu.vector_store %arg4[%c0_22, %c0_23], %51 {strides = array<i32>} : memref<1x128xf32, #tpu.memory_space<vmem>>, vector<1x128xf32>,
      %c0_24 = arith.constant 0 : index
      %c0_25 = arith.constant 0 : index
      %53 = vector.load %arg7[%c0_24, %c0_25] : memref<1x128xf32, #tpu.memory_space<vmem>>, vector<1x128xf32>
      %c0_26 = arith.constant 0 : index
      %c0_27 = arith.constant 0 : index
      %54 = vector.load %arg5[%c0_26, %c0_27] : memref<1x128xf32, #tpu.memory_space<vmem>>, vector<1x128xf32>
      tpu.vector_store %arg5[%c0_26, %c0_27], %53 {strides = array<i32>} : memref<1x128xf32, #tpu.memory_space<vmem>>, vector<1x128xf32>,
    } else {
    }
    return
  }
  func.func @transform_0(%arg0: i32, %arg1: i32) -> (i32, i32) {
    %c1_i32 = arith.constant 1 : i32
    %0 = arith.muli %arg0, %c1_i32 : i32
    %1 = arith.addi %0, %arg1 : i32
    %c0_i32 = arith.constant 0 : i32
    %c0_i32_0 = arith.constant 0 : i32
    return %1, %c0_i32 : i32, i32
  }
  func.func @transform_1(%arg0: i32, %arg1: i32) -> (i32, i32) {
    %c1_i32 = arith.constant 1 : i32
    %0 = arith.muli %arg0, %c1_i32 : i32
    %1 = arith.addi %0, %arg1 : i32
    %c0_i32 = arith.constant 0 : i32
    %c0_i32_0 = arith.constant 0 : i32
    return %1, %c0_i32 : i32, i32
  }
  func.func @transform_2(%arg0: i32, %arg1: i32) -> (i32, i32) {
    %c0_i32 = arith.constant 0 : i32
    %c0_i32_0 = arith.constant 0 : i32
    return %arg0, %c0_i32 : i32, i32
  }
  func.func @transform_3(%arg0: i32, %arg1: i32) -> (i32, i32) {
    %c0_i32 = arith.constant 0 : i32
    %c0_i32_0 = arith.constant 0 : i32
    return %arg0, %c0_i32 : i32, i32
  }
}

</mosaic_0001>

<llo_original>
// kernel: run.1
$region0: #{run.1}
  #allocation0 [shape = 'u32[]', space=smem, size = 0x4, offset = 0x4, fixed_abs, tag = 'smem constant byte address 0x4 - core index']
  #allocation1 [shape = 'u32[144,128]{1,0:T(1,128)}', space=vmem, size = 0x12000, scoped, tag = 'internal scratch']
  #allocation2 [shape = 'f32[1,128]{1,0:T(1,128)}', space=vmem, size = 0x200, scoped, tag = 'scratch operand']
  #allocation3 [shape = 'f32[1,128]{1,0:T(1,128)}', space=vmem, size = 0x200, scoped, tag = 'scratch operand']
  %s0 = inlined_call_operand.vmem [shape: f32[80,128], index: 0, kind: input, shape index: {}]
  %s1 = inlined_call_operand.vmem [shape: s32[80,2], index: 1, kind: input, shape index: {}]
  %s2 = inlined_call_operand.vmem [shape: f32[1,128], index: 2, kind: output, shape index: {0}]
  %s3 = inlined_call_operand.vmem [shape: f32[1,128], index: 3, kind: output, shape index: {1}]
  %4 = xla_tuple %s2, %s3
  %s5 = sld [smem:[#allocation0]]
  $region34: #{run.1} parent=0
    _
  %s7 = ssub.s32 1, %s5
  %s8 = scalar_select 0, %s7, %s5
  // Predicated region
  $region2: #{run.1} parent=0 // pred_check
    _
  $region3: #{run.1} parent=0 // pred_check_branch
    %10 = sbr.rel (0) target = $region5
  $region4: #{run.1} parent=0 // pred_region
    %s11 = sadd.s32 0, 0
    %s12 = smul.u32 10, %s11
    %p13 = scmp.lt.s32.totalorder %s12, 9
    %s14 = scalar_select %p13, %s12, 9
    %s15 = smul.addr %s14, 8
    %s16 = scalar_lea.vmem %s0, %s15
    %s17 = sadd.s32 0, 0
    %s18 = smul.u32 10, %s17
  $region5: #{run.1} parent=0 // pred_fallthru
    _
  // Predicated region
  $region6: #{run.1} parent=0 // pred_check
    _
  $region7: #{run.1} parent=0 // pred_check_branch
    %20 = sbr.rel (0) target = $region9
  $region8: #{run.1} parent=0 // pred_region
    %s21 = sadd.s32 0, 0
    %s22 = smul.u32 10, %s21
    %p23 = scmp.lt.s32.totalorder %s22, 9
    %s24 = scalar_select %p23, %s22, 9
    %s25 = smul.addr %s24, 8
    %s26 = scalar_lea.vmem %s1, %s25
    %s27 = sadd.s32 0, 0
    %s28 = smul.u32 10, %s27
  $region9: #{run.1} parent=0 // pred_fallthru
    _
  %s29 = sadd.s32 0, 0
  %s30 = smul.u32 10, %s29
  %p31 = scmp.lt.s32.totalorder %s30, 9
  %s32 = scalar_select %p31, %s30, 9
  %s33 = smul.addr %s32, 8
  %s34 = scalar_lea.vmem %s0, %s33
  %s35 = sadd.s32 0, 0
  %s36 = smul.u32 10, %s35
  %p37 = scmp.lt.s32.totalorder %s36, 9
  %s38 = scalar_select %p37, %s36, 9
  %s39 = smul.addr %s38, 8
  %s40 = scalar_lea.vmem %s1, %s39
  %s41 = sadd.s32 0, 0
  %s42 = smul.u32 10, %s41
  %p43 = scmp.lt.s32.totalorder %s42, 9
  %s44 = scalar_select %p43, %s42, 9
  %s45 = smul.addr %s44, 8
  %s46 = scalar_lea.vmem %s0, %s45
  %s47 = sadd.s32 0, 0
  %s48 = smul.u32 10, %s47
  %s49 = sadd.s32 0, 0
  %s50 = smul.u32 10, %s49
  %p51 = scmp.lt.s32.totalorder %s50, 9
  %s52 = scalar_select %p51, %s50, 9
  %s53 = smul.addr %s52, 8
  %s54 = scalar_lea.vmem %s1, %s53
  %s55 = sadd.s32 0, 0
  %s56 = smul.u32 10, %s55
  %p57 = scmp.eq.s32.totalorder 0, 0
  // Predicated region
  $region10: #{run.1} parent=0 // pred_check
    %p58 = pneg %p57
  $region11: #{run.1} parent=0 // pred_check_branch
    %60 = sbr.rel (%p58) target = $region13
  $region12: #{run.1} parent=0 // pred_region
    %61 = vst [vmem:[#allocation2] sm:$0x1] 0.0
    %62 = vst [vmem:[#allocation3] sm:$0x1] 0.0
  $region13: #{run.1} parent=0 // pred_fallthru
    _
  %v63 = vld [vmem:[%s46] sm:$0xff]
  %v64 = vld [vmem:[%s46 + $0x8] sm:$0xff]
  %v65 = vld [vmem:[%s46 + $0x10] sm:$0xff]
  %v66 = vld [vmem:[%s46 + $0x18] sm:$0xff]
  %v67 = vld [vmem:[%s46 + $0x20] sm:$0xff]
  %v68 = vld [vmem:[%s46 + $0x28] sm:$0xff]
  %v69 = vld [vmem:[%s46 + $0x30] sm:$0xff]
  %v70 = vld [vmem:[%s46 + $0x38] sm:$0xff]
  %v71 = vld [vmem:[%s46 + $0x40] sm:$0xff]
  %v72 = vld [vmem:[%s46 + $0x48] sm:$0xff]
  %v73 = vld [vmem:[%s54] sm:$0xff]
  %v74 = vld [vmem:[%s54 + $0x8] sm:$0xff]
  %v75 = vld [vmem:[%s54 + $0x10] sm:$0xff]
  %v76 = vld [vmem:[%s54 + $0x18] sm:$0xff]
  %v77 = vld [vmem:[%s54 + $0x20] sm:$0xff]
  %v78 = vld [vmem:[%s54 + $0x28] sm:$0xff]
  %v79 = vld [vmem:[%s54 + $0x30] sm:$0xff]
  %v80 = vld [vmem:[%s54 + $0x38] sm:$0xff]
  %v81 = vld [vmem:[%s54 + $0x40] sm:$0xff]
  %v82 = vld [vmem:[%s54 + $0x48] sm:$0xff]
  %vm83 = vcmp.ge.s32.totalorder %v73, 0
  %vm84 = vcmp.ge.s32.totalorder %v74, 0
  %vm85 = vcmp.ge.s32.totalorder %v75, 0
  %vm86 = vcmp.ge.s32.totalorder %v76, 0
  %vm87 = vcmp.ge.s32.totalorder %v77, 0
  %vm88 = vcmp.ge.s32.totalorder %v78, 0
  %vm89 = vcmp.ge.s32.totalorder %v79, 0
  %vm90 = vcmp.ge.s32.totalorder %v80, 0
  %vm91 = vcmp.ge.s32.totalorder %v81, 0
  %vm92 = vcmp.ge.s32.totalorder %v82, 0
  %v93 = vsel %vm83, 1, 0
  %v94 = vsel %vm84, 1, 0
  %v95 = vsel %vm85, 1, 0
  %v96 = vsel %vm86, 1, 0
  %v97 = vsel %vm87, 1, 0
  %v98 = vsel %vm88, 1, 0
  %v99 = vsel %vm89, 1, 0
  %v100 = vsel %vm90, 1, 0
  %v101 = vsel %vm91, 1, 0
  %v102 = vsel %vm92, 1, 0
  %v103 = vcvt.s32.f32 %v93
  %v104 = vcvt.s32.f32 %v94
  %v105 = vcvt.s32.f32 %v95
  %v106 = vcvt.s32.f32 %v96
  %v107 = vcvt.s32.f32 %v97
  %v108 = vcvt.s32.f32 %v98
  %v109 = vcvt.s32.f32 %v99
  %v110 = vcvt.s32.f32 %v100
  %v111 = vcvt.s32.f32 %v101
  %v112 = vcvt.s32.f32 %v102
  %113 = vmax.xlane.f32.xlu0 %v63
  %v114 = vpop.xlane.xlu0 %113
  %115 = vmax.xlane.f32.xlu0 %v64
  %v116 = vpop.xlane.xlu0 %115
  %117 = vmax.xlane.f32.xlu0 %v65
  %v118 = vpop.xlane.xlu0 %117
  %119 = vmax.xlane.f32.xlu0 %v66
  %v120 = vpop.xlane.xlu0 %119
  %121 = vmax.xlane.f32.xlu0 %v67
  %v122 = vpop.xlane.xlu0 %121
  %123 = vmax.xlane.f32.xlu0 %v68
  %v124 = vpop.xlane.xlu0 %123
  %125 = vmax.xlane.f32.xlu0 %v69
  %v126 = vpop.xlane.xlu0 %125
  %127 = vmax.xlane.f32.xlu0 %v70
  %v128 = vpop.xlane.xlu0 %127
  %129 = vmax.xlane.f32.xlu0 %v71
  %v130 = vpop.xlane.xlu0 %129
  %131 = vmax.xlane.f32.xlu0 %v72
  %v132 = vpop.xlane.xlu0 %131
  %v133 = vsub.f32 %v63, %v114
  %v134 = vsub.f32 %v64, %v116
  %v135 = vsub.f32 %v65, %v118
  %v136 = vsub.f32 %v66, %v120
  %v137 = vsub.f32 %v67, %v122
  %v138 = vsub.f32 %v68, %v124
  %v139 = vsub.f32 %v69, %v126
  %v140 = vsub.f32 %v70, %v128
  %v141 = vsub.f32 %v71, %v130
  %v142 = vsub.f32 %v72, %v132
  %v143 = vmul.f32 %v133, 1.442695
  %v144 = vpow.pop %v143
  %v145 = vmul.f32 %v134, 1.442695
  %v146 = vpow.pop %v145
  %v147 = vmul.f32 %v135, 1.442695
  %v148 = vpow.pop %v147
  %v149 = vmul.f32 %v136, 1.442695
  %v150 = vpow.pop %v149
  %v151 = vmul.f32 %v137, 1.442695
  %v152 = vpow.pop %v151
  %v153 = vmul.f32 %v138, 1.442695
  %v154 = vpow.pop %v153
  %v155 = vmul.f32 %v139, 1.442695
  %v156 = vpow.pop %v155
  %v157 = vmul.f32 %v140, 1.442695
  %v158 = vpow.pop %v157
  %v159 = vmul.f32 %v141, 1.442695
  %v160 = vpow.pop %v159
  %v161 = vmul.f32 %v142, 1.442695
  %v162 = vpow.pop %v161
  %163 = vadd.xlane.f32.xlu0 %v144
  %v164 = vpop.xlane.xlu0 %163
  %165 = vadd.xlane.f32.xlu0 %v146
  %v166 = vpop.xlane.xlu0 %165
  %167 = vadd.xlane.f32.xlu0 %v148
  %v168 = vpop.xlane.xlu0 %167
  %169 = vadd.xlane.f32.xlu0 %v150
  %v170 = vpop.xlane.xlu0 %169
  %171 = vadd.xlane.f32.xlu0 %v152
  %v172 = vpop.xlane.xlu0 %171
  %173 = vadd.xlane.f32.xlu0 %v154
  %v174 = vpop.xlane.xlu0 %173
  %175 = vadd.xlane.f32.xlu0 %v156
  %v176 = vpop.xlane.xlu0 %175
  %177 = vadd.xlane.f32.xlu0 %v158
  %v178 = vpop.xlane.xlu0 %177
  %179 = vadd.xlane.f32.xlu0 %v160
  %v180 = vpop.xlane.xlu0 %179
  %181 = vadd.xlane.f32.xlu0 %v162
  %v182 = vpop.xlane.xlu0 %181
  %v183 = vlog2.pop %v164
  %v184 = vmul.f32 %v183, 0.6931472
  %v185 = vlog2.pop %v166
  %v186 = vmul.f32 %v185, 0.6931472
  %v187 = vlog2.pop %v168
  %v188 = vmul.f32 %v187, 0.6931472
  %v189 = vlog2.pop %v170
  %v190 = vmul.f32 %v189, 0.6931472
  %v191 = vlog2.pop %v172
  %v192 = vmul.f32 %v191, 0.6931472
  %v193 = vlog2.pop %v174
  %v194 = vmul.f32 %v193, 0.6931472
  %v195 = vlog2.pop %v176
  %v196 = vmul.f32 %v195, 0.6931472
  %v197 = vlog2.pop %v178
  %v198 = vmul.f32 %v197, 0.6931472
  %v199 = vlog2.pop %v180
  %v200 = vmul.f32 %v199, 0.6931472
  %v201 = vlog2.pop %v182
  %v202 = vmul.f32 %v201, 0.6931472
  %v203 = vadd.f32 %v114, %v184
  %v204 = vadd.f32 %v116, %v186
  %v205 = vadd.f32 %v118, %v188
  %v206 = vadd.f32 %v120, %v190
  %v207 = vadd.f32 %v122, %v192
  %v208 = vadd.f32 %v124, %v194
  %v209 = vadd.f32 %v126, %v196
  %v210 = vadd.f32 %v128, %v198
  %v211 = vadd.f32 %v130, %v200
  %v212 = vadd.f32 %v132, %v202
  %v213 = vlaneseq
  %v214 = vand.u32 %v213, 127
  %215 = vset.pattern.permute.xlu0 0
  %216 = vperm.xlu0 %215, %v73
  %v217 = vpop.permute.xlu0 %216
  %218 = vset.pattern.permute.xlu0 0
  %219 = vperm.xlu0 %218, %v74
  %v220 = vpop.permute.xlu0 %219
  %221 = vset.pattern.permute.xlu0 0
  %222 = vperm.xlu0 %221, %v75
  %v223 = vpop.permute.xlu0 %222
  %224 = vset.pattern.permute.xlu0 0
  %225 = vperm.xlu0 %224, %v76
  %v226 = vpop.permute.xlu0 %225
  %227 = vset.pattern.permute.xlu0 0
  %228 = vperm.xlu0 %227, %v77
  %v229 = vpop.permute.xlu0 %228
  %230 = vset.pattern.permute.xlu0 0
  %231 = vperm.xlu0 %230, %v78
  %v232 = vpop.permute.xlu0 %231
  %233 = vset.pattern.permute.xlu0 0
  %234 = vperm.xlu0 %233, %v79
  %v235 = vpop.permute.xlu0 %234
  %236 = vset.pattern.permute.xlu0 0
  %237 = vperm.xlu0 %236, %v80
  %v238 = vpop.permute.xlu0 %237
  %239 = vset.pattern.permute.xlu0 0
  %240 = vperm.xlu0 %239, %v81
  %v241 = vpop.permute.xlu0 %240
  %242 = vset.pattern.permute.xlu0 0
  %243 = vperm.xlu0 %242, %v82
  %v244 = vpop.permute.xlu0 %243
  %vm245 = vcmp.eq.s32.totalorder %v214, %v217
  %vm246 = vcmp.eq.s32.totalorder %v214, %v220
  %vm247 = vcmp.eq.s32.totalorder %v214, %v223
  %vm248 = vcmp.eq.s32.totalorder %v214, %v226
  %vm249 = vcmp.eq.s32.totalorder %v214, %v229
  %vm250 = vcmp.eq.s32.totalorder %v214, %v232
  %vm251 = vcmp.eq.s32.totalorder %v214, %v235
  %vm252 = vcmp.eq.s32.totalorder %v214, %v238
  %vm253 = vcmp.eq.s32.totalorder %v214, %v241
  %vm254 = vcmp.eq.s32.totalorder %v214, %v244
  %v255 = vsel %vm245, %v63, 0.0
  %v256 = vsel %vm246, %v64, 0.0
  %v257 = vsel %vm247, %v65, 0.0
  %v258 = vsel %vm248, %v66, 0.0
  %v259 = vsel %vm249, %v67, 0.0
  %v260 = vsel %vm250, %v68, 0.0
  %v261 = vsel %vm251, %v69, 0.0
  %v262 = vsel %vm252, %v70, 0.0
  %v263 = vsel %vm253, %v71, 0.0
  %v264 = vsel %vm254, %v72, 0.0
  %265 = vadd.xlane.f32.xlu0 %v255
  %v266 = vpop.xlane.xlu0 %265
  %267 = vadd.xlane.f32.xlu0 %v256
  %v268 = vpop.xlane.xlu0 %267
  %269 = vadd.xlane.f32.xlu0 %v257
  %v270 = vpop.xlane.xlu0 %269
  %271 = vadd.xlane.f32.xlu0 %v258
  %v272 = vpop.xlane.xlu0 %271
  %273 = vadd.xlane.f32.xlu0 %v259
  %v274 = vpop.xlane.xlu0 %273
  %275 = vadd.xlane.f32.xlu0 %v260
  %v276 = vpop.xlane.xlu0 %275
  %277 = vadd.xlane.f32.xlu0 %v261
  %v278 = vpop.xlane.xlu0 %277
  %279 = vadd.xlane.f32.xlu0 %v262
  %v280 = vpop.xlane.xlu0 %279
  %281 = vadd.xlane.f32.xlu0 %v263
  %v282 = vpop.xlane.xlu0 %281
  %283 = vadd.xlane.f32.xlu0 %v264
  %v284 = vpop.xlane.xlu0 %283
  %v285 = vsub.f32 %v203, %v266
  %v286 = vsub.f32 %v204, %v268
  %v287 = vsub.f32 %v205, %v270
  %v288 = vsub.f32 %v206, %v272
  %v289 = vsub.f32 %v207, %v274
  %v290 = vsub.f32 %v208, %v276
  %v291 = vsub.f32 %v209, %v278
  %v292 = vsub.f32 %v210, %v280
  %v293 = vsub.f32 %v211, %v282
  %v294 = vsub.f32 %v212, %v284
  %v295 = vmul.f32 %v103, %v285
  %v296 = vmul.f32 %v104, %v286
  %v297 = vmul.f32 %v105, %v287
  %v298 = vmul.f32 %v106, %v288
  %v299 = vmul.f32 %v107, %v289
  %v300 = vmul.f32 %v108, %v290
  %v301 = vmul.f32 %v109, %v291
  %v302 = vmul.f32 %v110, %v292
  %v303 = vmul.f32 %v111, %v293
  %v304 = vmul.f32 %v112, %v294
  %305 = vset.pattern.permute.xlu0 1
  %306 = vperm.xlu0 %305, %v73
  %v307 = vpop.permute.xlu0 %306
  %308 = vset.pattern.permute.xlu0 1
  %309 = vperm.xlu0 %308, %v74
  %v310 = vpop.permute.xlu0 %309
  %311 = vset.pattern.permute.xlu0 1
  %312 = vperm.xlu0 %311, %v75
  %v313 = vpop.permute.xlu0 %312
  %314 = vset.pattern.permute.xlu0 1
  %315 = vperm.xlu0 %314, %v76
  %v316 = vpop.permute.xlu0 %315
  %317 = vset.pattern.permute.xlu0 1
  %318 = vperm.xlu0 %317, %v77
  %v319 = vpop.permute.xlu0 %318
  %320 = vset.pattern.permute.xlu0 1
  %321 = vperm.xlu0 %320, %v78
  %v322 = vpop.permute.xlu0 %321
  %323 = vset.pattern.permute.xlu0 1
  %324 = vperm.xlu0 %323, %v79
  %v325 = vpop.permute.xlu0 %324
  %326 = vset.pattern.permute.xlu0 1
  %327 = vperm.xlu0 %326, %v80
  %v328 = vpop.permute.xlu0 %327
  %329 = vset.pattern.permute.xlu0 1
  %330 = vperm.xlu0 %329, %v81
  %v331 = vpop.permute.xlu0 %330
  %332 = vset.pattern.permute.xlu0 1
  %333 = vperm.xlu0 %332, %v82
  %v334 = vpop.permute.xlu0 %333
  %vm335 = vcmp.eq.s32.totalorder %v214, %v307
  %vm336 = vcmp.eq.s32.totalorder %v214, %v310
  %vm337 = vcmp.eq.s32.totalorder %v214, %v313
  %vm338 = vcmp.eq.s32.totalorder %v214, %v316
  %vm339 = vcmp.eq.s32.totalorder %v214, %v319
  %vm340 = vcmp.eq.s32.totalorder %v214, %v322
  %vm341 = vcmp.eq.s32.totalorder %v214, %v325
  %vm342 = vcmp.eq.s32.totalorder %v214, %v328
  %vm343 = vcmp.eq.s32.totalorder %v214, %v331
  %vm344 = vcmp.eq.s32.totalorder %v214, %v334
  %v345 = vsel %vm335, 1, 0
  %v346 = vsel %vm336, 1, 0
  %v347 = vsel %vm337, 1, 0
  %v348 = vsel %vm338, 1, 0
  %v349 = vsel %vm339, 1, 0
  %v350 = vsel %vm340, 1, 0
  %v351 = vsel %vm341, 1, 0
  %v352 = vsel %vm342, 1, 0
  %v353 = vsel %vm343, 1, 0
  %v354 = vsel %vm344, 1, 0
  %v355 = vcvt.s32.f32 %v345
  %v356 = vcvt.s32.f32 %v346
  %v357 = vcvt.s32.f32 %v347
  %v358 = vcvt.s32.f32 %v348
  %v359 = vcvt.s32.f32 %v349
  %v360 = vcvt.s32.f32 %v350
  %v361 = vcvt.s32.f32 %v351
  %v362 = vcvt.s32.f32 %v352
  %v363 = vcvt.s32.f32 %v353
  %v364 = vcvt.s32.f32 %v354
  %v365 = vld [vmem:[#allocation2] sm:$0x1]
  %367 = vset.pattern.permute.xlu0 0
  %368 = vperm.xlu0 %367, %v295
  %v369 = vpop.permute.xlu0 %368
  %372 = vset.pattern.permute.xlu0 0
  %373 = vperm.xlu0 %372, %v296
  %v374 = vpop.permute.xlu0 %373
  %377 = vset.pattern.permute.xlu0 0
  %378 = vperm.xlu0 %377, %v297
  %v379 = vpop.permute.xlu0 %378
  %382 = vset.pattern.permute.xlu0 0
  %383 = vperm.xlu0 %382, %v298
  %v384 = vpop.permute.xlu0 %383
  %387 = vset.pattern.permute.xlu0 0
  %388 = vperm.xlu0 %387, %v299
  %v389 = vpop.permute.xlu0 %388
  %392 = vset.pattern.permute.xlu0 0
  %393 = vperm.xlu0 %392, %v300
  %v394 = vpop.permute.xlu0 %393
  %397 = vset.pattern.permute.xlu0 0
  %398 = vperm.xlu0 %397, %v301
  %v399 = vpop.permute.xlu0 %398
  %402 = vset.pattern.permute.xlu0 0
  %403 = vperm.xlu0 %402, %v302
  %v404 = vpop.permute.xlu0 %403
  %407 = vset.pattern.permute.xlu0 0
  %408 = vperm.xlu0 %407, %v303
  %v409 = vpop.permute.xlu0 %408
  %412 = vset.pattern.permute.xlu0 0
  %413 = vperm.xlu0 %412, %v304
  %v414 = vpop.permute.xlu0 %413
  %v416 = vmul.f32 %v369, %v355
  %v417 = vmul.f32 %v374, %v356
  %v418 = vmul.f32 %v379, %v357
  %v419 = vmul.f32 %v384, %v358
  %v420 = vmul.f32 %v389, %v359
  %v421 = vmul.f32 %v394, %v360
  %v422 = vmul.f32 %v399, %v361
  %v423 = vmul.f32 %v404, %v362
  %v424 = vmul.f32 %v409, %v363
  %v425 = vmul.f32 %v414, %v364
  %v426 = vadd.f32 %v416, %v417
  %v427 = vadd.f32 %v426, %v418
  %v428 = vadd.f32 %v427, %v419
  %v429 = vadd.f32 %v428, %v420
  %v430 = vadd.f32 %v429, %v421
  %v431 = vadd.f32 %v430, %v422
  %v432 = vadd.f32 %v431, %v423
  %v433 = vadd.f32 %v432, %v424
  %v434 = vadd.f32 %v433, %v425
  %v435 = vrot.slane %v434, 4
  %v436 = vadd.f32 %v434, %v435
  %v437 = vrot.slane %v436, 2
  %v438 = vadd.f32 %v436, %v437
  %v439 = vrot.slane %v438, 1
  %v440 = vadd.f32 %v438, %v439
  %v441 = vadd.f32 %v365, %v440
  %442 = vst [vmem:[#allocation2] sm:$0x1] %v441
  %v443 = vld [vmem:[#allocation3] sm:$0x1]
  %445 = vset.pattern.permute.xlu0 0
  %446 = vperm.xlu0 %445, %v103
  %v447 = vpop.permute.xlu0 %446
  %450 = vset.pattern.permute.xlu0 0
  %451 = vperm.xlu0 %450, %v104
  %v452 = vpop.permute.xlu0 %451
  %455 = vset.pattern.permute.xlu0 0
  %456 = vperm.xlu0 %455, %v105
  %v457 = vpop.permute.xlu0 %456
  %460 = vset.pattern.permute.xlu0 0
  %461 = vperm.xlu0 %460, %v106
  %v462 = vpop.permute.xlu0 %461
  %465 = vset.pattern.permute.xlu0 0
  %466 = vperm.xlu0 %465, %v107
  %v467 = vpop.permute.xlu0 %466
  %470 = vset.pattern.permute.xlu0 0
  %471 = vperm.xlu0 %470, %v108
  %v472 = vpop.permute.xlu0 %471
  %475 = vset.pattern.permute.xlu0 0
  %476 = vperm.xlu0 %475, %v109
  %v477 = vpop.permute.xlu0 %476
  %480 = vset.pattern.permute.xlu0 0
  %481 = vperm.xlu0 %480, %v110
  %v482 = vpop.permute.xlu0 %481
  %485 = vset.pattern.permute.xlu0 0
  %486 = vperm.xlu0 %485, %v111
  %v487 = vpop.permute.xlu0 %486
  %490 = vset.pattern.permute.xlu0 0
  %491 = vperm.xlu0 %490, %v112
  %v492 = vpop.permute.xlu0 %491
  %v494 = vmul.f32 %v447, %v355
  %v495 = vmul.f32 %v452, %v356
  %v496 = vmul.f32 %v457, %v357
  %v497 = vmul.f32 %v462, %v358
  %v498 = vmul.f32 %v467, %v359
  %v499 = vmul.f32 %v472, %v360
  %v500 = vmul.f32 %v477, %v361
  %v501 = vmul.f32 %v482, %v362
  %v502 = vmul.f32 %v487, %v363
  %v503 = vmul.f32 %v492, %v364
  %v504 = vadd.f32 %v494, %v495
  %v505 = vadd.f32 %v504, %v496
  %v506 = vadd.f32 %v505, %v497
  %v507 = vadd.f32 %v506, %v498
  %v508 = vadd.f32 %v507, %v499
  %v509 = vadd.f32 %v508, %v500
  %v510 = vadd.f32 %v509, %v501
  %v511 = vadd.f32 %v510, %v502
  %v512 = vadd.f32 %v511, %v503
  %v513 = vrot.slane %v512, 4
  %v514 = vadd.f32 %v512, %v513
  %v515 = vrot.slane %v514, 2
  %v516 = vadd.f32 %v514, %v515
  %v517 = vrot.slane %v516, 1
  %v518 = vadd.f32 %v516, %v517
  %v519 = vadd.f32 %v443, %v518
  %520 = vst [vmem:[#allocation3] sm:$0x1] %v519
  // Predicated region
  $region14: #{run.1} parent=0 // pred_check
    %p521 = pneg %p57
  $region15: #{run.1} parent=0 // pred_check_branch
    %523 = sbr.rel (%p521) target = $region17
  $region16: #{run.1} parent=0 // pred_region
    %v524 = vld [vmem:[#allocation2] sm:$0x1]
    %525 = vst [vmem:[%s2] sm:$0x1] %v524
    %v526 = vld [vmem:[#allocation3] sm:$0x1]
    %527 = vst [vmem:[%s3] sm:$0x1] %v526
  $region17: #{run.1} parent=0 // pred_fallthru
    _
  // Predicated region
  $region18: #{run.1} parent=0 // pred_check
    _
  $region19: #{run.1} parent=0 // pred_check_branch
    %529 = sbr.rel (0) target = $region21
  $region20: #{run.1} parent=0 // pred_region
    _
  $region21: #{run.1} parent=0 // pred_fallthru
    _
  // Predicated region
  $region22: #{run.1} parent=0 // pred_check
    _
  $region23: #{run.1} parent=0 // pred_check_branch
    %531 = sbr.rel (0) target = $region25
  $region24: #{run.1} parent=0 // pred_region
    _
  $region25: #{run.1} parent=0 // pred_fallthru
    _
  // Predicated region
  $region26: #{run.1} parent=0 // pred_check
    _
  $region27: #{run.1} parent=0 // pred_check_branch
    %533 = sbr.rel (0) target = $region29
  $region28: #{run.1} parent=0 // pred_region
    _
  $region29: #{run.1} parent=0 // pred_fallthru
    _
  // Predicated region
  $region30: #{run.1} parent=0 // pred_check
    _
  $region31: #{run.1} parent=0 // pred_check_branch
    %535 = sbr.rel (0) target = $region33
  $region32: #{run.1} parent=0 // pred_region
    _
  $region33: #{run.1} parent=0 // pred_fallthru
    _

</llo_original>
